<compile_context>
chip_gen: v7x
topology: tpu7x:2x2x1
jax: 0.10.0
libtpu: 0.0.40
codegen_flags: <defaults>
</compile_context>

<pallas_src>
import jax
import jax.numpy as jnp
from jax.experimental import pallas as pl
from jax.experimental.pallas import tpu as pltpu

HIDDEN = 256
TM_DEFAULT = 2048  # perf review: 2048-8192; 128 was grid-step-overhead bound


def _round_up(x, m):
    return (x + m - 1) // m * m


# ----------------------------------------------------------------------------
# Small-batch path: single invocation, whole arrays in VMEM, fc2 fused into a
# VPU/XLU reduce. Launch-bound by nature — route rollouts through the tiled path.
# ----------------------------------------------------------------------------
def _value_network_small_kernel(x_ref, w1_ref, b1_ref, w2_ref, b2_ref, out_ref):
    # x:(B,S)  w1:(S,H)  b1:(1,H)  w2:(1,H)  b2:(1,) SMEM  out:(1,1)
    h = jnp.dot(x_ref[...], w1_ref[...], preferred_element_type=jnp.float32)
    h = jnp.maximum(h + b1_ref[...], 0.0)                    # (B, HIDDEN)
    m = jnp.mean(h, axis=0, keepdims=True)                   # (1, HIDDEN)
    # mean_b(h_b @ w2 + b2) == mean_b(h_b) @ w2 + b2   (linearity)
    out_ref[...] = jnp.sum(m * w2_ref[...], axis=-1, keepdims=True) + b2_ref[0]


def value_network_forward(state, w1, b1, w2_row, b2):
    """state: (B, S) f32; returns (1,) f32 — matches torch.unsqueeze(mean, 0)."""
    out = pl.pallas_call(
        _value_network_small_kernel,
        out_shape=jax.ShapeDtypeStruct((1, 1), jnp.float32),
        in_specs=[
            pl.BlockSpec(memory_space=pltpu.MemorySpace.VMEM),  # x
            pl.BlockSpec(memory_space=pltpu.MemorySpace.VMEM),  # w1
            pl.BlockSpec(memory_space=pltpu.MemorySpace.VMEM),  # b1
            pl.BlockSpec(memory_space=pltpu.MemorySpace.VMEM),  # w2 row
            pl.BlockSpec(memory_space=pltpu.MemorySpace.SMEM),  # b2 scalar
        ],
        out_specs=pl.BlockSpec(memory_space=pltpu.MemorySpace.VMEM),
    )(state, w1, b1, w2_row, b2)
    return out.reshape(1)


# ----------------------------------------------------------------------------
# Batched rollout path: grid over batch tiles (no wrapper-side padding),
# accumulate sum_over_rows(relu(fc1(x))) in VMEM scratch, finalize per part.
# ----------------------------------------------------------------------------
def value_network_forward_batched(state, w1, b1, w2_row, b2, *,
                                  tm=TM_DEFAULT, num_parts=1,
                                  use_bf16_matmul=False):
    """Same semantics as value_network_forward; intended for large B.

    num_parts=2 splits the reduction over a leading "parallel" grid axis
    (useful on v7x's two TensorCores); num_parts=1 keeps everything in-kernel.
    """
    B, S = state.shape
    tm = int(max(8, _round_up(min(int(tm), _round_up(B, 8)), 8)))
    n_tiles = int(pl.cdiv(B, tm))
    num_parts = int(max(1, min(int(num_parts), n_tiles)))
    tiles_per_part = int(pl.cdiv(n_tiles, num_parts))
    # Static facts baked into the kernel (B is known at trace time).
    any_masking = num_parts * tiles_per_part * tm > B
    first_masked_tile = B // tm            # first tile containing rows >= B
    inv_b = 1.0 / float(B)                 # mean divides by the TRUE batch size
    b2_scale = 1.0 / float(num_parts)      # b2 added once in total
    out_lanes = 1 if num_parts == 1 else 128  # lane-dense per-part slot

    def kernel(x_ref, w1_ref, b1_ref, w2_ref, b2_ref, out_ref, acc_ref):
        i = pl.program_id(1)
        t = pl.program_id(0) * tiles_per_part + i   # global batch-tile index

        @pl.when(i == 0)
        def _init():
            acc_ref[...] = jnp.zeros_like(acc_ref)

        x = x_ref[...]
        w = w1_ref[...]
        if use_bf16_matmul:                 # v6e/v7x MXU path; f32 accumulation
            x = x.astype(jnp.bfloat16)
            w = w.astype(jnp.bfloat16)
        h = jnp.dot(x, w, preferred_element_type=jnp.float32)
        h = jnp.maximum(h + b1_ref[...], 0.0)          # (tm, HIDDEN) f32

        if any_masking:
            needs_mask = t >= first_masked_tile        # only boundary/padded tiles

            @pl.when(jnp.logical_not(needs_mask))
            def _full_tile():
                acc_ref[...] += jnp.sum(h, axis=0, keepdims=True)

            @pl.when(needs_mask)
            def _partial_tile():
                # OOB rows of the last block are unspecified -> select mask
                # (multiplicative 0-mask would propagate NaN).
                rows = t * tm + jax.lax.broadcasted_iota(jnp.int32, h.shape, 0)
                acc_ref[...] += jnp.sum(jnp.where(rows < B, h, 0.0),
                                        axis=0, keepdims=True)
        else:
            acc_ref[...] += jnp.sum(h, axis=0, keepdims=True)

        @pl.when(i == tiles_per_part - 1)
        def _finalize():
            m = acc_ref[...] * inv_b                   # mean over batch (true B)
            val = jnp.sum(m * w2_ref[...], axis=-1, keepdims=True) \
                + b2_ref[0] * b2_scale
            out_ref[...] = jnp.broadcast_to(val, out_ref.shape).astype(out_ref.dtype)

    def x_map(c, i):
        # Clamp so padded tile slots (num_parts > 1, n_tiles % num_parts != 0)
        # never issue an entirely out-of-bounds DMA; their rows are masked anyway.
        return (jnp.minimum(c * tiles_per_part + i, n_tiles - 1), 0)

    # Scoped-VMEM guard: only relevant if tm is pushed very large (v5e default 16 MiB).
    x_block_bytes = tm * S * state.dtype.itemsize
    est = 3 * x_block_bytes + 4 * S * HIDDEN * 4 + (1 << 20)
    cp_kwargs = dict(dimension_semantics=("parallel", "arbitrary"))
    if est > 12 * (1 << 20):
        cp_kwargs["vmem_limit_bytes"] = int(est + (8 << 20))

    out = pl.pallas_call(
        kernel,
        out_shape=jax.ShapeDtypeStruct((1, out_lanes * num_parts), jnp.float32),
        grid=(num_parts, tiles_per_part),
        in_specs=[
            pl.BlockSpec((tm, S), x_map),                       # x tile
            pl.BlockSpec((S, HIDDEN), lambda c, i: (0, 0)),     # w1 (resident)
            pl.BlockSpec((1, HIDDEN), lambda c, i: (0, 0)),     # b1 (resident)
            pl.BlockSpec((1, HIDDEN), lambda c, i: (0, 0)),     # w2 row (resident)
            pl.BlockSpec(memory_space=pltpu.MemorySpace.SMEM),  # b2 scalar
        ],
        out_specs=pl.BlockSpec((1, out_lanes), lambda c, i: (0, c)),
        scratch_shapes=[pltpu.VMEM((1, HIDDEN), jnp.float32)],
        compiler_params=pltpu.CompilerParams(**cp_kwargs),
    )(state, w1, b1, w2_row, b2)

    if num_parts == 1:
        return out.reshape(1)          # everything (incl. /B and +b2) done in-kernel
    # Tiny combine of per-core partial values (v7x dual-TC split).
    return jnp.sum(out.reshape(num_parts, out_lanes)[:, 0]).reshape(1)


# ----------------------------------------------------------------------------
# Init mimicking nn.Linear's uniform(-1/sqrt(fan_in), 1/sqrt(fan_in)).
# ----------------------------------------------------------------------------
def init_params(key, state_size):
    k1, k2, k3, k4 = jax.random.split(key, 4)
    lim1 = 1.0 / jnp.sqrt(jnp.float32(state_size))
    lim2 = 1.0 / jnp.sqrt(jnp.float32(HIDDEN))
    w1 = jax.random.uniform(k1, (state_size, HIDDEN), jnp.float32, -lim1, lim1)
    b1 = jax.random.uniform(k2, (1, HIDDEN), jnp.float32, -lim1, lim1)
    w2_row = jax.random.uniform(k3, (1, HIDDEN), jnp.float32, -lim2, lim2)
    b2 = jax.random.uniform(k4, (1,), jnp.float32, -lim2, lim2)
    return w1, b1, w2_row, b2


def _reference(state, w1, b1, w2_row, b2):
    h = jnp.maximum(state @ w1 + b1, 0.0)
    v = h @ w2_row.T + b2                       # (B, 1)
    return jnp.mean(v[:, 0]).reshape(1)


if __name__ == "__main__":
    # TODO(synk): debugPrinter(...) in the PyTorch forward is host-side logging
    # with no Pallas equivalent; it is intentionally omitted.
    key = jax.random.PRNGKey(0)
    k_x, k_p, k_b = jax.random.split(key, 3)

    batch, state_size = 8, 32
    state = jax.random.normal(k_x, (batch, state_size), jnp.float32)
    w1, b1, w2_row, b2 = init_params(k_p, state_size)

    # Small-batch fused kernel.
    out_small = value_network_forward(state, w1, b1, w2_row, b2)
    jax.block_until_ready(out_small)
    ref_small = _reference(state, w1, b1, w2_row, b2)
    assert out_small.shape == (1,)
    assert jnp.allclose(out_small, ref_small, atol=1e-4, rtol=1e-4), (out_small, ref_small)

    # Batched rollout path (300 is not a multiple of any tile -> exercises masking).
    big_batch = 300
    state_big = jax.random.normal(k_b, (big_batch, state_size), jnp.float32)
    ref_big = _reference(state_big, w1, b1, w2_row, b2)
    ref_256 = _reference(state_big[:256], w1, b1, w2_row, b2)

    # Default large tile (clamped to 304 here): single partial tile.
    out_a = value_network_forward_batched(state_big, w1, b1, w2_row, b2)
    # Several tiles; only the last one pays the mask cost.
    out_b = value_network_forward_batched(state_big, w1, b1, w2_row, b2, tm=128)
    # v7x-style dual-part split (also exercises padded tile slot + tiny combine).
    out_c = value_network_forward_batched(state_big, w1, b1, w2_row, b2, tm=128, num_parts=2)
    # Exact multiple of tm -> fully static unmasked path.
    out_d = value_network_forward_batched(state_big[:256], w1, b1, w2_row, b2, tm=128)
    # bf16 MXU path (f32 accumulation) -> looser tolerance.
    out_e = value_network_forward_batched(state_big, w1, b1, w2_row, b2, tm=128,
                                          use_bf16_matmul=True)

    for o in (out_a, out_b, out_c, out_d, out_e):
        jax.block_until_ready(o)
        assert o.shape == (1,)

    assert jnp.allclose(out_a, ref_big, atol=1e-4, rtol=1e-4), (out_a, ref_big)
    assert jnp.allclose(out_b, ref_big, atol=1e-4, rtol=1e-4), (out_b, ref_big)
    assert jnp.allclose(out_c, ref_big, atol=1e-4, rtol=1e-4), (out_c, ref_big)
    assert jnp.allclose(out_d, ref_256, atol=1e-4, rtol=1e-4), (out_d, ref_256)
    assert jnp.allclose(out_e, ref_big, atol=5e-2, rtol=5e-2), (out_e, ref_big)

    print("KERNEL_OK")
</pallas_src>

<mosaic_0001>
module attributes {stable_mosaic.version = 11 : i64} {
  func.func @_value_network_small_kernel(%arg0: memref<8x32xf32, #tpu.memory_space<vmem>>, %arg1: memref<32x256xf32, #tpu.memory_space<vmem>>, %arg2: memref<1x256xf32, #tpu.memory_space<vmem>>, %arg3: memref<1x256xf32, #tpu.memory_space<vmem>>, %arg4: memref<1xf32, #tpu.memory_space<smem>>, %arg5: memref<1x1xf32, #tpu.memory_space<vmem>>) attributes {dimension_semantics = [], scalar_prefetch = 0 : i64, scratch_operands = 0 : i64, tpu.core_type = #tpu.core_type<tc>} {
    %c0 = arith.constant 0 : index
    %c0_0 = arith.constant 0 : index
    %0 = vector.load %arg0[%c0, %c0_0] : memref<8x32xf32, #tpu.memory_space<vmem>>, vector<8x32xf32>
    %c0_1 = arith.constant 0 : index
    %c0_2 = arith.constant 0 : index
    %1 = vector.load %arg1[%c0_1, %c0_2] : memref<32x256xf32, #tpu.memory_space<vmem>>, vector<32x256xf32>
    %cst = arith.constant dense<0.000000e+00> : vector<8x256xf32>
    %2 = tpu.matmul %0, %1, %cst {dimension_numbers = #tpu.dot_dimension_numbers<[1], [0], [0], [1], [0, 0, 1, 1], [], []>} : vector<8x32xf32>, vector<32x256xf32>, vector<8x256xf32> -> vector<8x256xf32>
    %c0_3 = arith.constant 0 : index
    %c0_4 = arith.constant 0 : index
    %3 = vector.load %arg2[%c0_3, %c0_4] : memref<1x256xf32, #tpu.memory_space<vmem>>, vector<1x256xf32>
    %4 = vector.broadcast %3 : vector<1x256xf32> to vector<8x256xf32>
    %5 = arith.addf %2, %4 : vector<8x256xf32>
    %cst_5 = arith.constant 0.000000e+00 : f32
    %6 = vector.broadcast %cst_5 : f32 to vector<8x256xf32>
    %7 = arith.maximumf %5, %6 : vector<8x256xf32>
    %cst_6 = arith.constant dense<0.000000e+00> : vector<256xf32>
    %8 = vector.multi_reduction <add>, %7, %cst_6 [0] : vector<8x256xf32> to vector<256xf32>
    %9 = vector.shape_cast %8 : vector<256xf32> to vector<1x256xf32>
    %cst_7 = arith.constant 8.000000e+00 : f32
    %10 = vector.broadcast %cst_7 : f32 to vector<1x256xf32>
    %11 = arith.divf %9, %10 : vector<1x256xf32>
    %c0_8 = arith.constant 0 : index
    %c0_9 = arith.constant 0 : index
    %12 = vector.load %arg3[%c0_8, %c0_9] : memref<1x256xf32, #tpu.memory_space<vmem>>, vector<1x256xf32>
    %13 = arith.mulf %11, %12 : vector<1x256xf32>
    %cst_10 = arith.constant dense<0.000000e+00> : vector<1xf32>
    %14 = vector.multi_reduction <add>, %13, %cst_10 [1] : vector<1x256xf32> to vector<1xf32>
    %15 = vector.shape_cast %14 : vector<1xf32> to vector<1x1xf32>
    %c0_11 = arith.constant 0 : index
    %16 = memref.load %arg4[%c0_11] : memref<1xf32, #tpu.memory_space<smem>>
    %17 = vector.broadcast %16 : f32 to vector<1x1xf32>
    %18 = arith.addf %15, %17 : vector<1x1xf32>
    %c0_12 = arith.constant 0 : index
    %c0_13 = arith.constant 0 : index
    %19 = vector.load %arg5[%c0_12, %c0_13] : memref<1x1xf32, #tpu.memory_space<vmem>>, vector<1x1xf32>
    tpu.vector_store %arg5[%c0_12, %c0_13], %18 {strides = array<i32>} : memref<1x1xf32, #tpu.memory_space<vmem>>, vector<1x1xf32>,
    return
  }
}

</mosaic_0001>

<llo_original>
// kernel: tpu_custom_call.1
$region0: #{tpu_custom_call.1}
  #allocation0 [shape = 'u32[]', space=smem, size = 0x4, offset = 0x4, fixed_abs, tag = 'smem constant byte address 0x4 - core index']
  #allocation1 [shape = 'u32[144,128]{1,0:T(1,128)}', space=vmem, size = 0x12000, scoped, tag = 'internal scratch']
  #allocation2 [shape = 'f32[1]{0:T(128)S(6)}', space=smem, size = 0x200, scoped, tag = 'scoped memory for tpu_custom_call.1']
  %s0 = inlined_call_operand.hbm [shape: f32[8,32], index: 0, kind: input, shape index: {}]
  %s1 = inlined_call_operand.hbm [shape: f32[32,256], index: 1, kind: input, shape index: {}]
  %s2 = inlined_call_operand.vmem [shape: f32[1,256], index: 2, kind: input, shape index: {}]
  %s3 = inlined_call_operand.vmem [shape: f32[1,256], index: 3, kind: input, shape index: {}]
  %s4 = inlined_call_operand.<no memory space> [shape: f32[1], index: 4, kind: input, shape index: {}]
  %s5 = inlined_call_operand.hbm [shape: f32[1,1], index: 5, kind: output, shape index: {}]
  %s6 = sld [smem:[#allocation0]]
  $region38: #{tpu_custom_call.1} parent=0
    _
  %s8 = ssub.s32 1, %s6
  %s9 = scalar_select 0, %s8, %s6
  %10 = sst [smem:[#allocation2]] %s4
  $region1: #{tpu_custom_call.1} parent=0
    #allocation3 [shape = 'u8[4096]{0}', space=vmem, size = 0x1000, scoped, tag = 'input window, operand 0, single buffered']
    #allocation4 [shape = 's32[1]{0}', space=sflag, size = 0x4, scoped, tag = 'scoped memory for tpu_custom_call.1']
    #allocation5 [shape = 's32[1]{0}', space=sflag, size = 0x4, scoped, tag = 'scoped memory for tpu_custom_call.1']
    #allocation6 [shape = 'u8[32768]{0}', space=vmem, size = 0x8000, scoped, tag = 'input window, operand 1, single buffered']
    #allocation7 [shape = 's32[1]{0}', space=sflag, size = 0x4, scoped, tag = 'scoped memory for tpu_custom_call.1']
    #allocation8 [shape = 'u8[512]{0}', space=vmem, size = 0x400, scoped, tag = 'output window, operand 0, single buffered']
    %11 = vsyncpa [#allocation4], 0
    %12 = vsyncpa [#allocation7], 0
    %13 = vsyncpa [#allocation5], 0
    // Predicated region
    $region2: #{tpu_custom_call.1} parent=1 // pred_check
      _
    $region3: #{tpu_custom_call.1} parent=1 // pred_check_branch
      %15 = sbr.rel (0) target = $region5
    $region4: #{tpu_custom_call.1} parent=1 // pred_region
      %s17 = ssub.s32 128, 128
      %18 = vsyncadd [#allocation4], %s17
      %s20 = sshll.u32 [#allocation3], 4
      %s21 = int_to_ptr.vmem [resolvable:$true] %s20
      %23 = dma.hbm_to_vmem [thread:$0]  %s0, 128, %s21, [#allocation4]
    $region5: #{tpu_custom_call.1} parent=1 // pred_fallthru
      _
    // Predicated region
    $region6: #{tpu_custom_call.1} parent=1 // pred_check
      _
    $region7: #{tpu_custom_call.1} parent=1 // pred_check_branch
      %25 = sbr.rel (0) target = $region9
    $region8: #{tpu_custom_call.1} parent=1 // pred_region
      %s27 = ssub.s32 1024, 1024
      %28 = vsyncadd [#allocation7], %s27
      %s29 = sshll.u32 [#allocation6], 4
      %s30 = int_to_ptr.vmem [resolvable:$true] %s29
      %35 = dma.hbm_to_vmem [thread:$0]  %s1, 1024, %s30, [#allocation7], 256, 256, 16
    $region9: #{tpu_custom_call.1} parent=1 // pred_fallthru
      _
    // Predicated region
    $region10: #{tpu_custom_call.1} parent=1 // pred_check
      _
    $region11: #{tpu_custom_call.1} parent=1 // pred_check_branch
      %37 = sbr.rel (0) target = $region13
    $region12: #{tpu_custom_call.1} parent=1 // pred_region
      _
    $region13: #{tpu_custom_call.1} parent=1 // pred_fallthru
      _
    // Predicated region
    $region14: #{tpu_custom_call.1} parent=1 // pred_check
      _
    $region15: #{tpu_custom_call.1} parent=1 // pred_check_branch
      %39 = sbr.rel (0) target = $region17
    $region16: #{tpu_custom_call.1} parent=1 // pred_region
      _
    $region17: #{tpu_custom_call.1} parent=1 // pred_fallthru
      _
    // Predicated region
    $region18: #{tpu_custom_call.1} parent=1 // pred_check
      _
    $region19: #{tpu_custom_call.1} parent=1 // pred_check_branch
      %41 = sbr.rel (0) target = $region21
    $region20: #{tpu_custom_call.1} parent=1 // pred_region
      _
    $region21: #{tpu_custom_call.1} parent=1 // pred_fallthru
      _
    // Predicated region
    $region22: #{tpu_custom_call.1} parent=1 // pred_check
      _
    $region23: #{tpu_custom_call.1} parent=1 // pred_check_branch
      %43 = sbr.rel (0) target = $region25
    $region24: #{tpu_custom_call.1} parent=1 // pred_region
      %44 = dma.done [#allocation4], 128
    $region25: #{tpu_custom_call.1} parent=1 // pred_fallthru
      _
    // Predicated region
    $region26: #{tpu_custom_call.1} parent=1 // pred_check
      _
    $region27: #{tpu_custom_call.1} parent=1 // pred_check_branch
      %46 = sbr.rel (0) target = $region29
    $region28: #{tpu_custom_call.1} parent=1 // pred_region
      %47 = dma.done [#allocation7], 1024
    $region29: #{tpu_custom_call.1} parent=1 // pred_fallthru
      _
    %v48 = vld [vmem:[#allocation3] sm:$0xff]
    %v49 = vld [vmem:[#allocation6] sm:$0xff]
    %v50 = vld [vmem:[#allocation6 + $0x8] sm:$0xff]
    %v51 = vld [vmem:[#allocation6 + $0x10] sm:$0xff]
    %v52 = vld [vmem:[#allocation6 + $0x18] sm:$0xff]
    %v53 = vld [vmem:[#allocation6 + $0x20] sm:$0xff]
    %v54 = vld [vmem:[#allocation6 + $0x28] sm:$0xff]
    %v55 = vld [vmem:[#allocation6 + $0x30] sm:$0xff]
    %v56 = vld [vmem:[#allocation6 + $0x38] sm:$0xff]
    %v57 = vld [vmem:[%s2] sm:$0x3]
    %v59 = vlaneseq
    %v60 = vshrl.u32 %v59, 7
    %v61 = vsub.s32 0, %v60
    %v62 = vrot.slane %v57, %v61
    %v63 = vlaneseq
    %v64 = vshrl.u32 %v63, 7
    %v65 = vsub.s32 1, %v64
    %v66 = vrot.slane %v57, %v65
    %vm69 = vcmask 261120
    %v71 = vsel %vm69, %v48, 0
    %73 = vmatprep.subr.mxu0 %v50
    %74 = vmatpush1.msra.mxu0 %v49
    %75 = vmatprep.subr.mxu0 %v52
    %76 = vmatpush1.msra.mxu0 %v51
    %77 = vmatprep.subr.mxu0 %v54
    %78 = vmatpush1.msra.mxu0 %v53
    %79 = vmatprep.subr.mxu0 %v56
    %80 = vmatpush1.msra.mxu0 %v55
    %81 = vmatprep.subr.mxu0 0.0
    %82 = vmatpush1.msra.mxu0 0.0
    %83 = vmatprep.subr.mxu0 0.0
    %84 = vmatpush1.msra.mxu0 0.0
    %85 = vmatprep.subr.mxu0 0.0
    %86 = vmatpush1.msra.mxu0 0.0
    %87 = vmatprep.subr.mxu0 0.0
    %88 = vmatpush1.msra.mxu0 0.0
    %89 = vmatprep.subr.mxu0 0.0
    %90 = vmatpush1.msra.mxu0 0.0
    %91 = vmatprep.subr.mxu0 0.0
    %92 = vmatpush1.msra.mxu0 0.0
    %93 = vmatprep.subr.mxu0 0.0
    %94 = vmatpush1.msra.mxu0 0.0
    %95 = vmatprep.subr.mxu0 0.0
    %96 = vmatpush1.msra.mxu0 0.0
    %97 = vmatprep.subr.mxu0 0.0
    %98 = vmatpush1.msra.mxu0 0.0
    %99 = vmatprep.subr.mxu0 0.0
    %100 = vmatpush1.msra.mxu0 0.0
    %101 = vmatprep.subr.mxu0 0.0
    %102 = vmatpush1.msra.mxu0 0.0
    %103 = vmatprep.subr.mxu0 0.0
    %104 = vmatpush1.msra.mxu0 0.0
    %105 = vmatprep.subr.mxu0 0.0
    %106 = vmatpush1.msra.mxu0 0.0
    %107 = vmatprep.subr.mxu0 0.0
    %108 = vmatpush1.msra.mxu0 0.0
    %109 = vmatprep.subr.mxu0 0.0
    %110 = vmatpush1.msra.mxu0 0.0
    %111 = vmatprep.subr.mxu0 0.0
    %112 = vmatpush1.msra.mxu0 0.0
    %113 = vmatprep.subr.mxu0 0.0
    %114 = vmatpush1.msra.mxu0 0.0
    %115 = vmatprep.subr.mxu0 0.0
    %116 = vmatpush1.msra.mxu0 0.0
    %117 = vmatprep.subr.mxu0 0.0
    %118 = vmatpush1.msra.mxu0 0.0
    %119 = vmatprep.subr.mxu0 0.0
    %120 = vmatpush1.msra.mxu0 0.0
    %121 = vmatprep.subr.mxu0 0.0
    %122 = vmatpush1.msra.mxu0 0.0
    %123 = vmatprep.subr.mxu0 0.0
    %124 = vmatpush1.msra.mxu0 0.0
    %125 = vmatprep.subr.mxu0 0.0
    %126 = vmatpush1.msra.mxu0 0.0
    %127 = vmatprep.subr.mxu0 0.0
    %128 = vmatpush1.msra.mxu0 0.0
    %129 = vmatprep.subr.mxu0 0.0
    %130 = vmatpush1.msra.mxu0 0.0
    %131 = vmatprep.subr.mxu0 0.0
    %132 = vmatpush1.msra.mxu0 0.0
    %133 = vmatprep.subr.mxu0 0.0
    %134 = vmatpush1.msra.mxu0 0.0
    %135 = vmatprep.subr.mxu0 0.0
    %136 = vmatpush1.msra.mxu0 0.0
    %137 = vmatprep.mubr.f32.mxu0 0.0
    %138 = vmatmul.mubr.f32.gmra.mrb[0].mxu0 %v71
    %v139 = vpop.f32.mrb[0].mxu0
    %v140 = vadd.f32 %v62, %v139
    %v141 = vpop.f32.mrb[0].mxu0
    %v142 = vadd.f32 %v66, %v141
    %143 = vdwg.mxu0
    %v144 = vmax.f32 %v140, 0.0
    %v145 = vmax.f32 %v142, 0.0
    %v146 = vrot.slane %v144, 4
    %v147 = vadd.f32 %v144, %v146
    %v148 = vrot.slane %v147, 2
    %v149 = vadd.f32 %v147, %v148
    %v150 = vrot.slane %v149, 1
    %v151 = vadd.f32 %v149, %v150
    %v152 = vrot.slane %v145, 4
    %v153 = vadd.f32 %v145, %v152
    %v154 = vrot.slane %v153, 2
    %v155 = vadd.f32 %v153, %v154
    %v156 = vrot.slane %v155, 1
    %v157 = vadd.f32 %v155, %v156
    %v158 = vrcp.pop 8.0
    %v159 = vmul.f32 %v151, %v158
    %v160 = vmul.f32 %v157, %v158
    %v161 = vld [vmem:[%s3] sm:$0x3]
    %v163 = vlaneseq
    %v164 = vshrl.u32 %v163, 7
    %v165 = vsub.s32 0, %v164
    %v166 = vrot.slane %v161, %v165
    %v167 = vlaneseq
    %v168 = vshrl.u32 %v167, 7
    %v169 = vsub.s32 1, %v168
    %v170 = vrot.slane %v161, %v169
    %v173 = vmul.f32 %v159, %v166
    %v174 = vmul.f32 %v160, %v170
    %vm175 = vcmask 1040384
    %v176 = vsel %vm175, %v173, 0.0
    %v177 = vsel %vm175, %v174, 0.0
    %v178 = vadd.f32 %v176, %v177
    %179 = vadd.xlane.f32.xlu0 %v178
    %v180 = vpop.xlane.xlu0 %179
    %s181 = sld [smem:[#allocation2]]
    %v182 = vstv %s181
    %v183 = vadd.f32 %v180, %v182
    %vm184 = vcmask 0
    %185 = vst.msk [vmem:[#allocation8] sm:$0x1] %vm184, %v183
    // Predicated region
    $region30: #{tpu_custom_call.1} parent=1 // pred_check
      _
    $region31: #{tpu_custom_call.1} parent=1 // pred_check_branch
      %187 = sbr.rel (0) target = $region33
    $region32: #{tpu_custom_call.1} parent=1 // pred_region
      %s189 = ssub.s32 16, 16
      %190 = vsyncadd [#allocation5], %s189
      %s192 = sshll.u32 [#allocation8], 4
      %s193 = int_to_ptr.vmem [resolvable:$true] %s192
      %195 = dma.vmem_to_hbm [thread:$0]  %s193, 16, %s5, [#allocation5]
    $region33: #{tpu_custom_call.1} parent=1 // pred_fallthru
      _
    // Predicated region
    $region34: #{tpu_custom_call.1} parent=1 // pred_check
      _
    $region35: #{tpu_custom_call.1} parent=1 // pred_check_branch
      %197 = sbr.rel (0) target = $region37
    $region36: #{tpu_custom_call.1} parent=1 // pred_region
      %198 = dma.done [#allocation5], 16
    $region37: #{tpu_custom_call.1} parent=1 // pred_fallthru
      _
    %199 = vsyncpa [#allocation4], 1
    %200 = vsyncpa [#allocation7], 1
    %201 = vsyncpa [#allocation5], 1

</llo_original>
